<compile_context>
chip_gen: v6e
topology: v6e:2x2x1
jax: 0.10.0
libtpu: 0.0.40
codegen_flags: <defaults>
</compile_context>

<pallas_src>
import jax
import jax.numpy as jnp
from jax import lax
from jax.experimental import pallas as pl
from jax.experimental.pallas import tpu as pltpu

NUM_HEADS = 4
LN_EPS = 1e-5


def fusion_kernel(x_ref,                     # stacked input streams (2S, E) f32
                  g_ref, b_ref,              # LayerNorm gamma/beta (1, E) f32
                  wqkv_ref,                  # fused in-proj weight, pre-T (E, 3E) bf16 (Wq pre-scaled)
                  bqkv_ref,                  # fused in-proj bias (1, 3E) f32 (bq pre-scaled)
                  wo_ref,                    # out-proj weight, pre-T, (H, D, E) bf16
                  bo_ref,                    # out-proj bias (1, E) f32
                  fw_ref,                    # fusion weights (2,) f32 in SMEM
                  o_ref):                    # output (S, E) f32
    S2, E = x_ref.shape
    S = S2 // 2
    D = E // NUM_HEADS

    x = x_ref[...]                                                   # (2S, E) f32

    # ---- shared LayerNorm, single-pass moments (independent XLU reduces) ---
    inv_e = jnp.float32(1.0 / E)
    s1 = jnp.sum(x, axis=-1, keepdims=True)
    s2 = jnp.sum(x * x, axis=-1, keepdims=True)
    mu = s1 * inv_e
    var = s2 * inv_e - mu * mu
    xn = (x - mu) * lax.rsqrt(var + LN_EPS) * g_ref[...] + b_ref[...]

    # ---- fused Q|K|V projection: one weight push, one bias add -------------
    xn16 = xn.astype(jnp.bfloat16)
    # 1/sqrt(D) already folded into the Wq/bq slices host-side.
    qkv = jnp.dot(xn16, wqkv_ref[...],
                  preferred_element_type=jnp.float32) + bqkv_ref[...]  # (2S, 3E)

    # ---- cross-stream block-diagonal mask, built once (hoisted) ------------
    row = lax.broadcasted_iota(jnp.int32, (S2, S2), 0)
    col = lax.broadcasted_iota(jnp.int32, (S2, S2), 1)
    mask = jnp.where((row < S) == (col < S),
                     jnp.float32(0.0), jnp.float32(-1e30))            # (2S, 2S)

    fw0 = fw_ref[0]
    fw1 = fw_ref[1]

    # ---- per-head attention on the stacked streams; fuse streams, then Wo --
    acc = jnp.zeros((S, E), jnp.float32)
    for h in range(NUM_HEADS):                         # static loop: 4 heads
        lo = h * D
        qh = qkv[:, lo:lo + D].astype(jnp.bfloat16)            # (2S, D)
        kh = qkv[:, E + lo:E + lo + D].astype(jnp.bfloat16)    # (2S, D)
        vh = qkv[:, 2 * E + lo:2 * E + lo + D].astype(jnp.bfloat16)
        # contract on D directly (no explicit k.T relayout); block-diag mask
        # keeps the two streams independent inside one (2S, 2S) matmul.
        scores = lax.dot_general(qh, kh, (((1,), (1,)), ((), ())),
                                 preferred_element_type=jnp.float32) + mask
        m = jnp.max(scores, axis=-1, keepdims=True)
        e = jnp.exp(scores - m)
        denom = jnp.sum(e, axis=-1, keepdims=True)
        p = e * pl.reciprocal(denom, approx=True)              # EUP, not VALU divide
        out_h = jnp.dot(p.astype(jnp.bfloat16), vh,
                        preferred_element_type=jnp.float32)    # (2S, D)
        # fuse the two streams BEFORE the out-projection (linearity of Wo):
        head_fused = (fw0 * out_h[:S, :] + fw1 * out_h[S:, :]).astype(jnp.bfloat16)
        # block-row decomposition of Wo: attn @ Wo == sum_h head_h @ Wo[hD:(h+1)D]
        acc = acc + jnp.dot(head_fused, wo_ref[h],
                            preferred_element_type=jnp.float32)  # (S, E)

    # bias is linear too: applied once, weighted by (fw0 + fw1)
    o_ref[...] = acc + (fw0 + fw1) * bo_ref[...]


def fusion_block(x_spatial, x_spectral, params):
    """params: pre-transposed / pre-scaled / bf16-cast kernel parameters."""
    S, E = x_spatial.shape
    D = E // NUM_HEADS
    S2 = 2 * S

    # stack the two streams in the wrapper (tiny XLA concat, fuses away)
    x_stacked = jnp.concatenate([x_spatial, x_spectral], axis=0)   # (2S, E)

    vmem = pl.BlockSpec(memory_space=pltpu.MemorySpace.VMEM)
    smem = pl.BlockSpec(memory_space=pltpu.MemorySpace.SMEM)
    args = (
        x_stacked,
        params["gamma"], params["beta"],
        params["wqkv_t"], params["bqkv"],
        params["wo_t"], params["bo"],
        params["fusion_w"],
    )
    in_specs = [vmem] * (len(args) - 1) + [smem]

    # advisory cost model for XLA scheduling around the custom call
    flops = (2 * S2 * E * (3 * E)                    # fused QKV projection
             + NUM_HEADS * 2 * 2 * S2 * S2 * D       # scores + PV (block-diag)
             + 2 * S * E * E)                        # out-projection (S rows)
    transcendentals = NUM_HEADS * (S2 * S2 + S2) + S2
    bytes_accessed = (S2 * E + S * E) * 4 + (E * 3 * E + E * E) * 2 + 7 * E * 4 + 2 * 4

    return pl.pallas_call(
        fusion_kernel,
        out_shape=jax.ShapeDtypeStruct((S, E), jnp.float32),
        in_specs=in_specs,
        out_specs=vmem,
        cost_estimate=pl.CostEstimate(flops=flops,
                                      transcendentals=transcendentals,
                                      bytes_accessed=bytes_accessed),
    )(*args)


def make_params(key, hidden):
    """Synthetic parameters matching nn.LayerNorm / nn.MultiheadAttention shapes,
    pre-processed once (host-side) into the layout the kernel expects."""
    E = hidden
    D = E // NUM_HEADS
    ks = jax.random.split(key, 8)
    # LayerNorm defaults: gamma=1, beta=0
    gamma = jnp.ones((1, E), jnp.float32)
    beta = jnp.zeros((1, E), jnp.float32)
    # nn.MultiheadAttention in_proj_weight is (3E, E) with q/k/v row slices;
    # here we draw q/k/v directly (same shapes) and store the x @ W layout.
    wq = jax.random.normal(ks[0], (E, E), jnp.float32) * 0.1
    wk = jax.random.normal(ks[1], (E, E), jnp.float32) * 0.1
    wv = jax.random.normal(ks[2], (E, E), jnp.float32) * 0.1
    bq = jax.random.normal(ks[3], (1, E), jnp.float32) * 0.1
    bk = jax.random.normal(ks[4], (1, E), jnp.float32) * 0.1
    bv = jax.random.normal(ks[5], (1, E), jnp.float32) * 0.1
    wo = jax.random.normal(ks[6], (E, E), jnp.float32) * 0.1   # out_proj.weight
    bo = jax.random.normal(ks[7], (1, E), jnp.float32) * 0.1
    scale = 1.0 / float(D) ** 0.5
    # One-time prep: transpose to x@W form, fold 1/sqrt(D) into Wq/bq, fuse
    # Q|K|V weights/biases along the output dim, cast matmul weights to bf16
    # (kernel accumulates in f32), split Wo per head.
    wqkv_t = jnp.concatenate([wq.T * scale, wk.T, wv.T], axis=1)   # (E, 3E)
    bqkv = jnp.concatenate([bq * scale, bk, bv], axis=1)           # (1, 3E)
    return {
        "gamma": gamma, "beta": beta,
        "wqkv_t": wqkv_t.astype(jnp.bfloat16),
        "bqkv": bqkv,
        "wo_t": wo.T.reshape(NUM_HEADS, D, E).astype(jnp.bfloat16),
        "bo": bo,
        "fusion_w": jnp.full((2,), 0.5, jnp.float32),   # torch.ones(2) / 2
    }


if __name__ == "__main__":
    S, E = 8, 32  # seq=8, hidden_channels=32 (divisible by num_heads=4)
    key = jax.random.PRNGKey(0)
    k1, k2, k3 = jax.random.split(key, 3)
    x_spatial = jax.random.normal(k1, (S, E), jnp.float32)
    x_spectral = jax.random.normal(k2, (S, E), jnp.float32)
    params = make_params(k3, E)

    out = fusion_block(x_spatial, x_spectral, params)
    jax.block_until_ready(out)
    assert out.shape == (S, E) and out.dtype == jnp.float32
    print("KERNEL_OK")
</pallas_src>

<mosaic_0001>
module attributes {stable_mosaic.version = 11 : i64} {
  func.func @fusion_kernel(%arg0: memref<16x32xf32, #tpu.memory_space<vmem>>, %arg1: memref<1x32xf32, #tpu.memory_space<vmem>>, %arg2: memref<1x32xf32, #tpu.memory_space<vmem>>, %arg3: memref<32x96xbf16, #tpu.memory_space<vmem>>, %arg4: memref<1x96xf32, #tpu.memory_space<vmem>>, %arg5: memref<4x8x32xbf16, #tpu.memory_space<vmem>>, %arg6: memref<1x32xf32, #tpu.memory_space<vmem>>, %arg7: memref<2xf32, #tpu.memory_space<smem>>, %arg8: memref<8x32xf32, #tpu.memory_space<vmem>>) attributes {dimension_semantics = [], scalar_prefetch = 0 : i64, scratch_operands = 0 : i64, tpu.core_type = #tpu.core_type<tc>} {
    %c0 = arith.constant 0 : index
    %c0_0 = arith.constant 0 : index
    %0 = vector.load %arg0[%c0, %c0_0] : memref<16x32xf32, #tpu.memory_space<vmem>>, vector<16x32xf32>
    %cst = arith.constant dense<0.000000e+00> : vector<16xf32>
    %1 = vector.multi_reduction <add>, %0, %cst [1] : vector<16x32xf32> to vector<16xf32>
    %2 = vector.shape_cast %1 : vector<16xf32> to vector<16x1xf32>
    %3 = arith.mulf %0, %0 : vector<16x32xf32>
    %cst_1 = arith.constant dense<0.000000e+00> : vector<16xf32>
    %4 = vector.multi_reduction <add>, %3, %cst_1 [1] : vector<16x32xf32> to vector<16xf32>
    %5 = vector.shape_cast %4 : vector<16xf32> to vector<16x1xf32>
    %cst_2 = arith.constant 3.125000e-02 : f32
    %6 = vector.broadcast %cst_2 : f32 to vector<16x1xf32>
    %7 = arith.mulf %2, %6 : vector<16x1xf32>
    %cst_3 = arith.constant 3.125000e-02 : f32
    %8 = vector.broadcast %cst_3 : f32 to vector<16x1xf32>
    %9 = arith.mulf %5, %8 : vector<16x1xf32>
    %10 = arith.mulf %7, %7 : vector<16x1xf32>
    %11 = arith.subf %9, %10 : vector<16x1xf32>
    %12 = vector.broadcast %7 : vector<16x1xf32> to vector<16x32xf32>
    %13 = arith.subf %0, %12 : vector<16x32xf32>
    %cst_4 = arith.constant 9.99999974E-6 : f32
    %14 = vector.broadcast %cst_4 : f32 to vector<16x1xf32>
    %15 = arith.addf %11, %14 : vector<16x1xf32>
    %16 = math.rsqrt %15 : vector<16x1xf32>
    %17 = vector.broadcast %16 : vector<16x1xf32> to vector<16x32xf32>
    %18 = arith.mulf %13, %17 : vector<16x32xf32>
    %c0_5 = arith.constant 0 : index
    %c0_6 = arith.constant 0 : index
    %19 = vector.load %arg1[%c0_5, %c0_6] : memref<1x32xf32, #tpu.memory_space<vmem>>, vector<1x32xf32>
    %20 = vector.broadcast %19 : vector<1x32xf32> to vector<16x32xf32>
    %21 = arith.mulf %18, %20 : vector<16x32xf32>
    %c0_7 = arith.constant 0 : index
    %c0_8 = arith.constant 0 : index
    %22 = vector.load %arg2[%c0_7, %c0_8] : memref<1x32xf32, #tpu.memory_space<vmem>>, vector<1x32xf32>
    %23 = vector.broadcast %22 : vector<1x32xf32> to vector<16x32xf32>
    %24 = arith.addf %21, %23 : vector<16x32xf32>
    %25 = arith.truncf %24 : vector<16x32xf32> to vector<16x32xbf16>
    %c0_9 = arith.constant 0 : index
    %c0_10 = arith.constant 0 : index
    %26 = vector.load %arg3[%c0_9, %c0_10] : memref<32x96xbf16, #tpu.memory_space<vmem>>, vector<32x96xbf16>
    %cst_11 = arith.constant dense<0.000000e+00> : vector<16x96xf32>
    %27 = tpu.matmul %25, %26, %cst_11 {dimension_numbers = #tpu.dot_dimension_numbers<[1], [0], [0], [1], [0, 0, 1, 1], [], []>} : vector<16x32xbf16>, vector<32x96xbf16>, vector<16x96xf32> -> vector<16x96xf32>
    %c0_12 = arith.constant 0 : index
    %c0_13 = arith.constant 0 : index
    %28 = vector.load %arg4[%c0_12, %c0_13] : memref<1x96xf32, #tpu.memory_space<vmem>>, vector<1x96xf32>
    %29 = vector.broadcast %28 : vector<1x96xf32> to vector<16x96xf32>
    %30 = arith.addf %27, %29 : vector<16x96xf32>
    %31 = tpu.iota {dimensions = array<i32: 0>} : vector<16x16xi32>
    %32 = tpu.iota {dimensions = array<i32: 1>} : vector<16x16xi32>
    %c8_i32 = arith.constant 8 : i32
    %33 = vector.broadcast %c8_i32 : i32 to vector<16x16xi32>
    %34 = arith.cmpi slt, %31, %33 : vector<16x16xi32>
    %c8_i32_14 = arith.constant 8 : i32
    %35 = vector.broadcast %c8_i32_14 : i32 to vector<16x16xi32>
    %36 = arith.cmpi slt, %32, %35 : vector<16x16xi32>
    %37 = arith.xori %34, %36 : vector<16x16xi1>
    %cst_15 = arith.constant dense<true> : vector<16x16xi1>
    %38 = arith.xori %37, %cst_15 : vector<16x16xi1>
    %cst_16 = arith.constant 0.000000e+00 : f32
    %cst_17 = arith.constant -1.000000e+30 : f32
    %39 = vector.broadcast %cst_16 : f32 to vector<16x16xf32>
    %40 = vector.broadcast %cst_17 : f32 to vector<16x16xf32>
    %41 = arith.select %38, %39, %40 : vector<16x16xi1>, vector<16x16xf32>
    %c0_18 = arith.constant 0 : index
    %42 = memref.load %arg7[%c0_18] : memref<2xf32, #tpu.memory_space<smem>>
    %c1 = arith.constant 1 : index
    %43 = memref.load %arg7[%c1] : memref<2xf32, #tpu.memory_space<smem>>
    %cst_19 = arith.constant 0.000000e+00 : f32
    %44 = vector.broadcast %cst_19 : f32 to vector<8x32xf32>
    %45 = vector.extract_strided_slice %30 {offsets = [0, 0], sizes = [16, 8], strides = [1, 1]} : vector<16x96xf32> to vector<16x8xf32>
    %46 = arith.truncf %45 : vector<16x8xf32> to vector<16x8xbf16>
    %47 = vector.extract_strided_slice %30 {offsets = [0, 32], sizes = [16, 8], strides = [1, 1]} : vector<16x96xf32> to vector<16x8xf32>
    %48 = arith.truncf %47 : vector<16x8xf32> to vector<16x8xbf16>
    %49 = vector.extract_strided_slice %30 {offsets = [0, 64], sizes = [16, 8], strides = [1, 1]} : vector<16x96xf32> to vector<16x8xf32>
    %50 = arith.truncf %49 : vector<16x8xf32> to vector<16x8xbf16>
    %cst_20 = arith.constant dense<0.000000e+00> : vector<16x16xf32>
    %51 = tpu.matmul %46, %48, %cst_20 {dimension_numbers = #tpu.dot_dimension_numbers<[1], [1], [0], [0], [0, 0, 1, 0], [], []>} : vector<16x8xbf16>, vector<16x8xbf16>, vector<16x16xf32> -> vector<16x16xf32>
    %52 = arith.addf %51, %41 : vector<16x16xf32>
    %cst_21 = arith.constant dense<0xFF800000> : vector<16xf32>
    %53 = vector.multi_reduction <maximumf>, %52, %cst_21 [1] : vector<16x16xf32> to vector<16xf32>
    %54 = vector.shape_cast %53 : vector<16xf32> to vector<16x1xf32>
    %55 = vector.broadcast %54 : vector<16x1xf32> to vector<16x16xf32>
    %56 = arith.subf %52, %55 : vector<16x16xf32>
    %57 = math.exp %56 : vector<16x16xf32>
    %cst_22 = arith.constant dense<0.000000e+00> : vector<16xf32>
    %58 = vector.multi_reduction <add>, %57, %cst_22 [1] : vector<16x16xf32> to vector<16xf32>
    %59 = vector.shape_cast %58 : vector<16xf32> to vector<16x1xf32>
    %60 = tpu.reciprocal %59 {approx = true} : vector<16x1xf32> -> vector<16x1xf32>
    %61 = vector.broadcast %60 : vector<16x1xf32> to vector<16x16xf32>
    %62 = arith.mulf %57, %61 : vector<16x16xf32>
    %63 = arith.truncf %62 : vector<16x16xf32> to vector<16x16xbf16>
    %cst_23 = arith.constant dense<0.000000e+00> : vector<16x8xf32>
    %64 = tpu.matmul %63, %50, %cst_23 {dimension_numbers = #tpu.dot_dimension_numbers<[1], [0], [0], [1], [0, 0, 1, 1], [], []>} : vector<16x16xbf16>, vector<16x8xbf16>, vector<16x8xf32> -> vector<16x8xf32>
    %65 = vector.extract_strided_slice %64 {offsets = [0, 0], sizes = [8, 8], strides = [1, 1]} : vector<16x8xf32> to vector<8x8xf32>
    %66 = vector.broadcast %42 : f32 to vector<8x8xf32>
    %67 = arith.mulf %66, %65 : vector<8x8xf32>
    %68 = vector.extract_strided_slice %64 {offsets = [8, 0], sizes = [8, 8], strides = [1, 1]} : vector<16x8xf32> to vector<8x8xf32>
    %69 = vector.broadcast %43 : f32 to vector<8x8xf32>
    %70 = arith.mulf %69, %68 : vector<8x8xf32>
    %71 = arith.addf %67, %70 : vector<8x8xf32>
    %72 = arith.truncf %71 : vector<8x8xf32> to vector<8x8xbf16>
    %c0_24 = arith.constant 0 : index
    %c0_25 = arith.constant 0 : index
    %c0_26 = arith.constant 0 : index
    %73 = vector.load %arg5[%c0_24, %c0_25, %c0_26] : memref<4x8x32xbf16, #tpu.memory_space<vmem>>, vector<1x8x32xbf16>
    %74 = vector.shape_cast %73 : vector<1x8x32xbf16> to vector<8x32xbf16>
    %cst_27 = arith.constant dense<0.000000e+00> : vector<8x32xf32>
    %75 = tpu.matmul %72, %74, %cst_27 {dimension_numbers = #tpu.dot_dimension_numbers<[1], [0], [0], [1], [0, 0, 1, 1], [], []>} : vector<8x8xbf16>, vector<8x32xbf16>, vector<8x32xf32> -> vector<8x32xf32>
    %76 = arith.addf %44, %75 : vector<8x32xf32>
    %77 = vector.extract_strided_slice %30 {offsets = [0, 8], sizes = [16, 8], strides = [1, 1]} : vector<16x96xf32> to vector<16x8xf32>
    %78 = arith.truncf %77 : vector<16x8xf32> to vector<16x8xbf16>
    %79 = vector.extract_strided_slice %30 {offsets = [0, 40], sizes = [16, 8], strides = [1, 1]} : vector<16x96xf32> to vector<16x8xf32>
    %80 = arith.truncf %79 : vector<16x8xf32> to vector<16x8xbf16>
    %81 = vector.extract_strided_slice %30 {offsets = [0, 72], sizes = [16, 8], strides = [1, 1]} : vector<16x96xf32> to vector<16x8xf32>
    %82 = arith.truncf %81 : vector<16x8xf32> to vector<16x8xbf16>
    %cst_28 = arith.constant dense<0.000000e+00> : vector<16x16xf32>
    %83 = tpu.matmul %78, %80, %cst_28 {dimension_numbers = #tpu.dot_dimension_numbers<[1], [1], [0], [0], [0, 0, 1, 0], [], []>} : vector<16x8xbf16>, vector<16x8xbf16>, vector<16x16xf32> -> vector<16x16xf32>
    %84 = arith.addf %83, %41 : vector<16x16xf32>
    %cst_29 = arith.constant dense<0xFF800000> : vector<16xf32>
    %85 = vector.multi_reduction <maximumf>, %84, %cst_29 [1] : vector<16x16xf32> to vector<16xf32>
    %86 = vector.shape_cast %85 : vector<16xf32> to vector<16x1xf32>
    %87 = vector.broadcast %86 : vector<16x1xf32> to vector<16x16xf32>
    %88 = arith.subf %84, %87 : vector<16x16xf32>
    %89 = math.exp %88 : vector<16x16xf32>
    %cst_30 = arith.constant dense<0.000000e+00> : vector<16xf32>
    %90 = vector.multi_reduction <add>, %89, %cst_30 [1] : vector<16x16xf32> to vector<16xf32>
    %91 = vector.shape_cast %90 : vector<16xf32> to vector<16x1xf32>
    %92 = tpu.reciprocal %91 {approx = true} : vector<16x1xf32> -> vector<16x1xf32>
    %93 = vector.broadcast %92 : vector<16x1xf32> to vector<16x16xf32>
    %94 = arith.mulf %89, %93 : vector<16x16xf32>
    %95 = arith.truncf %94 : vector<16x16xf32> to vector<16x16xbf16>
    %cst_31 = arith.constant dense<0.000000e+00> : vector<16x8xf32>
    %96 = tpu.matmul %95, %82, %cst_31 {dimension_numbers = #tpu.dot_dimension_numbers<[1], [0], [0], [1], [0, 0, 1, 1], [], []>} : vector<16x16xbf16>, vector<16x8xbf16>, vector<16x8xf32> -> vector<16x8xf32>
    %97 = vector.extract_strided_slice %96 {offsets = [0, 0], sizes = [8, 8], strides = [1, 1]} : vector<16x8xf32> to vector<8x8xf32>
    %98 = vector.broadcast %42 : f32 to vector<8x8xf32>
    %99 = arith.mulf %98, %97 : vector<8x8xf32>
    %100 = vector.extract_strided_slice %96 {offsets = [8, 0], sizes = [8, 8], strides = [1, 1]} : vector<16x8xf32> to vector<8x8xf32>
    %101 = vector.broadcast %43 : f32 to vector<8x8xf32>
    %102 = arith.mulf %101, %100 : vector<8x8xf32>
    %103 = arith.addf %99, %102 : vector<8x8xf32>
    %104 = arith.truncf %103 : vector<8x8xf32> to vector<8x8xbf16>
    %c1_32 = arith.constant 1 : index
    %c0_33 = arith.constant 0 : index
    %c0_34 = arith.constant 0 : index
    %105 = vector.load %arg5[%c1_32, %c0_33, %c0_34] : memref<4x8x32xbf16, #tpu.memory_space<vmem>>, vector<1x8x32xbf16>
    %106 = vector.shape_cast %105 : vector<1x8x32xbf16> to vector<8x32xbf16>
    %cst_35 = arith.constant dense<0.000000e+00> : vector<8x32xf32>
    %107 = tpu.matmul %104, %106, %cst_35 {dimension_numbers = #tpu.dot_dimension_numbers<[1], [0], [0], [1], [0, 0, 1, 1], [], []>} : vector<8x8xbf16>, vector<8x32xbf16>, vector<8x32xf32> -> vector<8x32xf32>
    %108 = arith.addf %76, %107 : vector<8x32xf32>
    %109 = vector.extract_strided_slice %30 {offsets = [0, 16], sizes = [16, 8], strides = [1, 1]} : vector<16x96xf32> to vector<16x8xf32>
    %110 = arith.truncf %109 : vector<16x8xf32> to vector<16x8xbf16>
    %111 = vector.extract_strided_slice %30 {offsets = [0, 48], sizes = [16, 8], strides = [1, 1]} : vector<16x96xf32> to vector<16x8xf32>
    %112 = arith.truncf %111 : vector<16x8xf32> to vector<16x8xbf16>
    %113 = vector.extract_strided_slice %30 {offsets = [0, 80], sizes = [16, 8], strides = [1, 1]} : vector<16x96xf32> to vector<16x8xf32>
    %114 = arith.truncf %113 : vector<16x8xf32> to vector<16x8xbf16>
    %cst_36 = arith.constant dense<0.000000e+00> : vector<16x16xf32>
    %115 = tpu.matmul %110, %112, %cst_36 {dimension_numbers = #tpu.dot_dimension_numbers<[1], [1], [0], [0], [0, 0, 1, 0], [], []>} : vector<16x8xbf16>, vector<16x8xbf16>, vector<16x16xf32> -> vector<16x16xf32>
    %116 = arith.addf %115, %41 : vector<16x16xf32>
    %cst_37 = arith.constant dense<0xFF800000> : vector<16xf32>
    %117 = vector.multi_reduction <maximumf>, %116, %cst_37 [1] : vector<16x16xf32> to vector<16xf32>
    %118 = vector.shape_cast %117 : vector<16xf32> to vector<16x1xf32>
    %119 = vector.broadcast %118 : vector<16x1xf32> to vector<16x16xf32>
    %120 = arith.subf %116, %119 : vector<16x16xf32>
    %121 = math.exp %120 : vector<16x16xf32>
    %cst_38 = arith.constant dense<0.000000e+00> : vector<16xf32>
    %122 = vector.multi_reduction <add>, %121, %cst_38 [1] : vector<16x16xf32> to vector<16xf32>
    %123 = vector.shape_cast %122 : vector<16xf32> to vector<16x1xf32>
    %124 = tpu.reciprocal %123 {approx = true} : vector<16x1xf32> -> vector<16x1xf32>
    %125 = vector.broadcast %124 : vector<16x1xf32> to vector<16x16xf32>
    %126 = arith.mulf %121, %125 : vector<16x16xf32>
    %127 = arith.truncf %126 : vector<16x16xf32> to vector<16x16xbf16>
    %cst_39 = arith.constant dense<0.000000e+00> : vector<16x8xf32>
    %128 = tpu.matmul %127, %114, %cst_39 {dimension_numbers = #tpu.dot_dimension_numbers<[1], [0], [0], [1], [0, 0, 1, 1], [], []>} : vector<16x16xbf16>, vector<16x8xbf16>, vector<16x8xf32> -> vector<16x8xf32>
    %129 = vector.extract_strided_slice %128 {offsets = [0, 0], sizes = [8, 8], strides = [1, 1]} : vector<16x8xf32> to vector<8x8xf32>
    %130 = vector.broadcast %42 : f32 to vector<8x8xf32>
    %131 = arith.mulf %130, %129 : vector<8x8xf32>
    %132 = vector.extract_strided_slice %128 {offsets = [8, 0], sizes = [8, 8], strides = [1, 1]} : vector<16x8xf32> to vector<8x8xf32>
    %133 = vector.broadcast %43 : f32 to vector<8x8xf32>
    %134 = arith.mulf %133, %132 : vector<8x8xf32>
    %135 = arith.addf %131, %134 : vector<8x8xf32>
    %136 = arith.truncf %135 : vector<8x8xf32> to vector<8x8xbf16>
    %c2 = arith.constant 2 : index
    %c0_40 = arith.constant 0 : index
    %c0_41 = arith.constant 0 : index
    %137 = vector.load %arg5[%c2, %c0_40, %c0_41] : memref<4x8x32xbf16, #tpu.memory_space<vmem>>, vector<1x8x32xbf16>
    %138 = vector.shape_cast %137 : vector<1x8x32xbf16> to vector<8x32xbf16>
    %cst_42 = arith.constant dense<0.000000e+00> : vector<8x32xf32>
    %139 = tpu.matmul %136, %138, %cst_42 {dimension_numbers = #tpu.dot_dimension_numbers<[1], [0], [0], [1], [0, 0, 1, 1], [], []>} : vector<8x8xbf16>, vector<8x32xbf16>, vector<8x32xf32> -> vector<8x32xf32>
    %140 = arith.addf %108, %139 : vector<8x32xf32>
    %141 = vector.extract_strided_slice %30 {offsets = [0, 24], sizes = [16, 8], strides = [1, 1]} : vector<16x96xf32> to vector<16x8xf32>
    %142 = arith.truncf %141 : vector<16x8xf32> to vector<16x8xbf16>
    %143 = vector.extract_strided_slice %30 {offsets = [0, 56], sizes = [16, 8], strides = [1, 1]} : vector<16x96xf32> to vector<16x8xf32>
    %144 = arith.truncf %143 : vector<16x8xf32> to vector<16x8xbf16>
    %145 = vector.extract_strided_slice %30 {offsets = [0, 88], sizes = [16, 8], strides = [1, 1]} : vector<16x96xf32> to vector<16x8xf32>
    %146 = arith.truncf %145 : vector<16x8xf32> to vector<16x8xbf16>
    %cst_43 = arith.constant dense<0.000000e+00> : vector<16x16xf32>
    %147 = tpu.matmul %142, %144, %cst_43 {dimension_numbers = #tpu.dot_dimension_numbers<[1], [1], [0], [0], [0, 0, 1, 0], [], []>} : vector<16x8xbf16>, vector<16x8xbf16>, vector<16x16xf32> -> vector<16x16xf32>
    %148 = arith.addf %147, %41 : vector<16x16xf32>
    %cst_44 = arith.constant dense<0xFF800000> : vector<16xf32>
    %149 = vector.multi_reduction <maximumf>, %148, %cst_44 [1] : vector<16x16xf32> to vector<16xf32>
    %150 = vector.shape_cast %149 : vector<16xf32> to vector<16x1xf32>
    %151 = vector.broadcast %150 : vector<16x1xf32> to vector<16x16xf32>
    %152 = arith.subf %148, %151 : vector<16x16xf32>
    %153 = math.exp %152 : vector<16x16xf32>
    %cst_45 = arith.constant dense<0.000000e+00> : vector<16xf32>
    %154 = vector.multi_reduction <add>, %153, %cst_45 [1] : vector<16x16xf32> to vector<16xf32>
    %155 = vector.shape_cast %154 : vector<16xf32> to vector<16x1xf32>
    %156 = tpu.reciprocal %155 {approx = true} : vector<16x1xf32> -> vector<16x1xf32>
    %157 = vector.broadcast %156 : vector<16x1xf32> to vector<16x16xf32>
    %158 = arith.mulf %153, %157 : vector<16x16xf32>
    %159 = arith.truncf %158 : vector<16x16xf32> to vector<16x16xbf16>
    %cst_46 = arith.constant dense<0.000000e+00> : vector<16x8xf32>
    %160 = tpu.matmul %159, %146, %cst_46 {dimension_numbers = #tpu.dot_dimension_numbers<[1], [0], [0], [1], [0, 0, 1, 1], [], []>} : vector<16x16xbf16>, vector<16x8xbf16>, vector<16x8xf32> -> vector<16x8xf32>
    %161 = vector.extract_strided_slice %160 {offsets = [0, 0], sizes = [8, 8], strides = [1, 1]} : vector<16x8xf32> to vector<8x8xf32>
    %162 = vector.broadcast %42 : f32 to vector<8x8xf32>
    %163 = arith.mulf %162, %161 : vector<8x8xf32>
    %164 = vector.extract_strided_slice %160 {offsets = [8, 0], sizes = [8, 8], strides = [1, 1]} : vector<16x8xf32> to vector<8x8xf32>
    %165 = vector.broadcast %43 : f32 to vector<8x8xf32>
    %166 = arith.mulf %165, %164 : vector<8x8xf32>
    %167 = arith.addf %163, %166 : vector<8x8xf32>
    %168 = arith.truncf %167 : vector<8x8xf32> to vector<8x8xbf16>
    %c3 = arith.constant 3 : index
    %c0_47 = arith.constant 0 : index
    %c0_48 = arith.constant 0 : index
    %169 = vector.load %arg5[%c3, %c0_47, %c0_48] : memref<4x8x32xbf16, #tpu.memory_space<vmem>>, vector<1x8x32xbf16>
    %170 = vector.shape_cast %169 : vector<1x8x32xbf16> to vector<8x32xbf16>
    %cst_49 = arith.constant dense<0.000000e+00> : vector<8x32xf32>
    %171 = tpu.matmul %168, %170, %cst_49 {dimension_numbers = #tpu.dot_dimension_numbers<[1], [0], [0], [1], [0, 0, 1, 1], [], []>} : vector<8x8xbf16>, vector<8x32xbf16>, vector<8x32xf32> -> vector<8x32xf32>
    %172 = arith.addf %140, %171 : vector<8x32xf32>
    %173 = arith.addf %42, %43 : f32
    %c0_50 = arith.constant 0 : index
    %c0_51 = arith.constant 0 : index
    %174 = vector.load %arg6[%c0_50, %c0_51] : memref<1x32xf32, #tpu.memory_space<vmem>>, vector<1x32xf32>
    %175 = vector.broadcast %173 : f32 to vector<1x32xf32>
    %176 = arith.mulf %175, %174 : vector<1x32xf32>
    %177 = vector.broadcast %176 : vector<1x32xf32> to vector<8x32xf32>
    %178 = arith.addf %172, %177 : vector<8x32xf32>
    %c0_52 = arith.constant 0 : index
    %c0_53 = arith.constant 0 : index
    %179 = vector.load %arg8[%c0_52, %c0_53] : memref<8x32xf32, #tpu.memory_space<vmem>>, vector<8x32xf32>
    tpu.vector_store %arg8[%c0_52, %c0_53], %178 {strides = array<i32>} : memref<8x32xf32, #tpu.memory_space<vmem>>, vector<8x32xf32>,
    return
  }
}

</mosaic_0001>

<llo_original>
// kernel: tpu_custom_call.1
$region0: #{tpu_custom_call.1}
  #allocation0 [shape = 'u32[]', space=smem, size = 0x4, offset = 0x4, fixed_abs, tag = 'smem constant byte address 0x4 - core index']
  #allocation1 [shape = 'u32[144,128]{1,0:T(1,128)}', space=vmem, size = 0x12000, scoped, tag = 'internal scratch']
  %s0 = inlined_call_operand.hbm [shape: f32[16,32], index: 0, kind: input, shape index: {}]
  %s1 = inlined_call_operand.vmem [shape: f32[1,32], index: 1, kind: input, shape index: {}]
  %s2 = inlined_call_operand.vmem [shape: f32[1,32], index: 2, kind: input, shape index: {}]
  %s3 = inlined_call_operand.hbm [shape: bf16[32,96], index: 3, kind: input, shape index: {}]
  %s4 = inlined_call_operand.vmem [shape: f32[1,96], index: 4, kind: input, shape index: {}]
  %s5 = inlined_call_operand.hbm [shape: bf16[4,8,32], index: 5, kind: input, shape index: {}]
  %s6 = inlined_call_operand.vmem [shape: f32[1,32], index: 6, kind: input, shape index: {}]
  %s7 = inlined_call_operand.vmem [shape: f32[2], index: 7, kind: input, shape index: {}]
  %s8 = inlined_call_operand.hbm [shape: f32[8,32], index: 8, kind: output, shape index: {}]
  %s9 = sld [smem:[#allocation0]]
  $region58: #{tpu_custom_call.1} parent=0
    _
  %s11 = ssub.s32 1, %s9
  %s12 = scalar_select 0, %s11, %s9
  $region1: #{tpu_custom_call.1} parent=0
    #allocation2 [shape = 'u8[8192]{0}', space=vmem, size = 0x2000, scoped, tag = 'input window, operand 0, single buffered']
    #allocation3 [shape = 's32[1]{0}', space=sflag, size = 0x4, scoped, tag = 'scoped memory for tpu_custom_call.1']
    #allocation4 [shape = 's32[1]{0}', space=sflag, size = 0x4, scoped, tag = 'scoped memory for tpu_custom_call.1']
    #allocation5 [shape = 's32[1]{0}', space=sflag, size = 0x4, scoped, tag = 'scoped memory for tpu_custom_call.1']
    #allocation6 [shape = 'u8[8192]{0}', space=vmem, size = 0x2000, scoped, tag = 'input window, operand 3, single buffered']
    #allocation7 [shape = 's32[1]{0}', space=sflag, size = 0x4, scoped, tag = 'scoped memory for tpu_custom_call.1']
    #allocation8 [shape = 'u8[8192]{0}', space=vmem, size = 0x2000, scoped, tag = 'input window, operand 5, single buffered']
    #allocation9 [shape = 'u8[512]{0}', space=smem, size = 0x200, scoped, tag = 'input window, operand 7, single buffered']
    #allocation10 [shape = 'u8[4096]{0}', space=vmem, size = 0x1000, scoped, tag = 'output window, operand 0, single buffered']
    %13 = vsyncpa [#allocation3], 0
    %14 = vsyncpa [#allocation7], 0
    %15 = vsyncpa [#allocation5], 0
    %16 = vsyncpa [#allocation4], 0
    // Predicated region
    $region2: #{tpu_custom_call.1} parent=1 // pred_check
      _
    $region3: #{tpu_custom_call.1} parent=1 // pred_check_branch
      %18 = sbr.rel (0) target = $region5
    $region4: #{tpu_custom_call.1} parent=1 // pred_region
      %s20 = ssub.s32 256, 256
      %21 = vsyncadd [#allocation3], %s20
      %s22 = sshll.u32 [#allocation2], 4
      %s23 = int_to_ptr.vmem [resolvable:$true] %s22
      %28 = dma.hbm_to_vmem [thread:$0]  %s0, 256, %s23, [#allocation3], 128, 128, 8
    $region5: #{tpu_custom_call.1} parent=1 // pred_fallthru
      _
    // Predicated region
    $region6: #{tpu_custom_call.1} parent=1 // pred_check
      _
    $region7: #{tpu_custom_call.1} parent=1 // pred_check_branch
      %30 = sbr.rel (0) target = $region9
    $region8: #{tpu_custom_call.1} parent=1 // pred_region
      _
    $region9: #{tpu_custom_call.1} parent=1 // pred_fallthru
      _
    // Predicated region
    $region10: #{tpu_custom_call.1} parent=1 // pred_check
      _
    $region11: #{tpu_custom_call.1} parent=1 // pred_check_branch
      %32 = sbr.rel (0) target = $region13
    $region12: #{tpu_custom_call.1} parent=1 // pred_region
      _
    $region13: #{tpu_custom_call.1} parent=1 // pred_fallthru
      _
    // Predicated region
    $region14: #{tpu_custom_call.1} parent=1 // pred_check
      _
    $region15: #{tpu_custom_call.1} parent=1 // pred_check_branch
      %34 = sbr.rel (0) target = $region17
    $region16: #{tpu_custom_call.1} parent=1 // pred_region
      %s36 = ssub.s32 256, 256
      %37 = vsyncadd [#allocation7], %s36
      %s38 = sshll.u32 [#allocation6], 4
      %s39 = int_to_ptr.vmem [resolvable:$true] %s38
      %44 = dma.hbm_to_vmem [thread:$0]  %s3, 256, %s39, [#allocation7], 64, 64, 4
    $region17: #{tpu_custom_call.1} parent=1 // pred_fallthru
      _
    // Predicated region
    $region18: #{tpu_custom_call.1} parent=1 // pred_check
      _
    $region19: #{tpu_custom_call.1} parent=1 // pred_check_branch
      %46 = sbr.rel (0) target = $region21
    $region20: #{tpu_custom_call.1} parent=1 // pred_region
      _
    $region21: #{tpu_custom_call.1} parent=1 // pred_fallthru
      _
    // Predicated region
    $region22: #{tpu_custom_call.1} parent=1 // pred_check
      _
    $region23: #{tpu_custom_call.1} parent=1 // pred_check_branch
      %48 = sbr.rel (0) target = $region25
    $region24: #{tpu_custom_call.1} parent=1 // pred_region
      %s50 = ssub.s32 256, 256
      %51 = vsyncadd [#allocation7], %s50
      %s52 = sshll.u32 [#allocation8], 4
      %s53 = int_to_ptr.vmem [resolvable:$true] %s52
      %58 = dma.hbm_to_vmem [thread:$0]  %s5, 256, %s53, [#allocation7], 64, 64, 4
    $region25: #{tpu_custom_call.1} parent=1 // pred_fallthru
      _
    // Predicated region
    $region26: #{tpu_custom_call.1} parent=1 // pred_check
      _
    $region27: #{tpu_custom_call.1} parent=1 // pred_check_branch
      %60 = sbr.rel (0) target = $region29
    $region28: #{tpu_custom_call.1} parent=1 // pred_region
      _
    $region29: #{tpu_custom_call.1} parent=1 // pred_fallthru
      _
    // Predicated region
    $region30: #{tpu_custom_call.1} parent=1 // pred_check
      _
    $region31: #{tpu_custom_call.1} parent=1 // pred_check_branch
      %62 = sbr.rel (0) target = $region33
    $region32: #{tpu_custom_call.1} parent=1 // pred_region
      %s64 = ssub.s32 16, 16
      %65 = vsyncadd [#allocation5], %s64
      %s67 = sshll.u32 %s7, 4
      %s68 = int_to_ptr.vmem [resolvable:$true] %s67
      %70 = dma.vmem_to_smem %s68, 16, [#allocation9], [#allocation5]
    $region33: #{tpu_custom_call.1} parent=1 // pred_fallthru
      _
    // Predicated region
    $region34: #{tpu_custom_call.1} parent=1 // pred_check
      _
    $region35: #{tpu_custom_call.1} parent=1 // pred_check_branch
      %72 = sbr.rel (0) target = $region37
    $region36: #{tpu_custom_call.1} parent=1 // pred_region
      %73 = dma.done [#allocation3], 256
    $region37: #{tpu_custom_call.1} parent=1 // pred_fallthru
      _
    // Predicated region
    $region38: #{tpu_custom_call.1} parent=1 // pred_check
      _
    $region39: #{tpu_custom_call.1} parent=1 // pred_check_branch
      %75 = sbr.rel (0) target = $region41
    $region40: #{tpu_custom_call.1} parent=1 // pred_region
      %76 = dma.done [#allocation7], 256
    $region41: #{tpu_custom_call.1} parent=1 // pred_fallthru
      _
    // Predicated region
    $region42: #{tpu_custom_call.1} parent=1 // pred_check
      _
    $region43: #{tpu_custom_call.1} parent=1 // pred_check_branch
      %78 = sbr.rel (0) target = $region45
    $region44: #{tpu_custom_call.1} parent=1 // pred_region
      %79 = dma.done [#allocation7], 256
    $region45: #{tpu_custom_call.1} parent=1 // pred_fallthru
      _
    // Predicated region
    $region46: #{tpu_custom_call.1} parent=1 // pred_check
      _
    $region47: #{tpu_custom_call.1} parent=1 // pred_check_branch
      %81 = sbr.rel (0) target = $region49
    $region48: #{tpu_custom_call.1} parent=1 // pred_region
      %82 = dma.done [#allocation5], 16
    $region49: #{tpu_custom_call.1} parent=1 // pred_fallthru
      _
    %83 = sfence
    %v85 = vld [vmem:[#allocation2] sm:$0xff]
    %v86 = vld [vmem:[#allocation2 + $0x8] sm:$0xff]
    %vm87 = vcmask 261120
    %v88 = vsel %vm87, %v85, 0.0
    %89 = vadd.xlane.f32.xlu0 %v88
    %v90 = vpop.xlane.xlu0 %89
    %v91 = vsel %vm87, %v86, 0.0
    %92 = vadd.xlane.f32.xlu0 %v91
    %v93 = vpop.xlane.xlu0 %92
    %v94 = vmul.f32 %v85, %v85
    %v95 = vmul.f32 %v86, %v86
    %v96 = vsel %vm87, %v94, 0.0
    %97 = vadd.xlane.f32.xlu0 %v96
    %v98 = vpop.xlane.xlu0 %97
    %v99 = vsel %vm87, %v95, 0.0
    %100 = vadd.xlane.f32.xlu0 %v99
    %v101 = vpop.xlane.xlu0 %100
    %v102 = vmul.f32 %v90, 0.03125
    %v103 = vmul.f32 %v93, 0.03125
    %v104 = vmul.f32 %v98, 0.03125
    %v105 = vmul.f32 %v101, 0.03125
    %v106 = vmul.f32 %v102, %v102
    %v107 = vmul.f32 %v103, %v103
    %v108 = vsub.f32 %v104, %v106
    %v109 = vsub.f32 %v105, %v107
    %v110 = vsub.f32 %v85, %v102
    %v111 = vsub.f32 %v86, %v103
    %v112 = vadd.f32 %v108, 1e-05
    %v113 = vadd.f32 %v109, 1e-05
    %v114 = vrsqrt.pop %v112
    %v115 = vrsqrt.pop %v113
    %v116 = vmul.f32 %v110, %v114
    %v117 = vmul.f32 %v111, %v115
    %v118 = vld [vmem:[%s1] sm:$0x1]
    %v120 = vlaneseq
    %v121 = vshrl.u32 %v120, 7
    %v122 = vsub.s32 0, %v121
    %v123 = vrot.slane %v118, %v122
    %v125 = vmul.f32 %v116, %v123
    %v126 = vmul.f32 %v117, %v123
    %v127 = vld [vmem:[%s2] sm:$0x1]
    %v129 = vlaneseq
    %v130 = vshrl.u32 %v129, 7
    %v131 = vsub.s32 0, %v130
    %v132 = vrot.slane %v127, %v131
    %v134 = vadd.f32 %v125, %v132
    %v135 = vadd.f32 %v126, %v132
    %v136 = vpack.c.bf16 %v135, %v134
    %v137 = vld [vmem:[#allocation6] sm:$0xf]
    %v138 = vld [vmem:[#allocation6 + $0x4] sm:$0xf]
    %v139 = vld [vmem:[#allocation6 + $0x8] sm:$0xf]
    %v140 = vld [vmem:[#allocation6 + $0xc] sm:$0xf]
    %v141 = vld [vmem:[%s4] sm:$0x1]
    %v143 = vlaneseq
    %v144 = vshrl.u32 %v143, 7
    %v145 = vsub.s32 0, %v144
    %v146 = vrot.slane %v141, %v145
    %v152 = vunpack.c.l.b16 %v137
    %v153 = vunpack.c.l.b16 %v138
    %v154 = vunpack.c.l.b16 %v139
    %v155 = vunpack.c.l.b16 %v140
    %v156 = vpack.c.b16 %v153, %v152
    %v157 = vpack.c.b16 %v155, %v154
    %v161 = vsel %vm87, %v136, 0
    %163 = vmatprep.subr.bf16.mxu0 0
    %164 = vmatpush1.bf16.msra.mxu0 0
    %165 = vmatprep.subr.bf16.mxu0 0
    %166 = vmatpush1.bf16.msra.mxu0 0
    %167 = vmatprep.subr.bf16.mxu0 0
    %168 = vmatpush1.bf16.msra.mxu0 0
    %169 = vmatprep.subr.bf16.mxu0 0
    %170 = vmatpush1.bf16.msra.mxu0 0
    %171 = vmatprep.subr.bf16.mxu0 0
    %172 = vmatpush1.bf16.msra.mxu0 0
    %173 = vmatprep.subr.bf16.mxu0 0
    %174 = vmatpush1.bf16.msra.mxu0 0
    %175 = vmatprep.subr.bf16.mxu0 0
    %176 = vmatpush1.bf16.msra.mxu0 %v157
    %177 = vmatprep.subr.bf16.mxu0 0
    %178 = vmatpush1.bf16.msra.mxu0 %v156
    %179 = vmatprep.subr.bf16.mxu0 0
    %180 = vmatpush2.bf16.msra.mxu0 0
    %181 = vmatprep.subr.bf16.mxu0 0
    %182 = vmatpush2.bf16.msra.mxu0 0
    %183 = vmatprep.subr.bf16.mxu0 0
    %184 = vmatpush2.bf16.msra.mxu0 0
    %185 = vmatprep.subr.bf16.mxu0 0
    %186 = vmatpush2.bf16.msra.mxu0 0
    %187 = vmatprep.subr.bf16.mxu0 0
    %188 = vmatpush2.bf16.msra.mxu0 0
    %189 = vmatprep.subr.bf16.mxu0 0
    %190 = vmatpush2.bf16.msra.mxu0 0
    %191 = vmatprep.subr.bf16.mxu0 0
    %192 = vmatpush2.bf16.msra.mxu0 0
    %193 = vmatprep.subr.bf16.mxu0 0
    %194 = vmatpush2.bf16.msra.mxu0 0
    %195 = vmatprep.mubr.bf16.mxu0 0
    %196 = vmatmul.mubr.bf16.gmra.mxu0 %v161
    %v197 = vpop.f32.mrf.mxu0
    %v198 = vadd.f32 %v146, %v197
    %v199 = vpop.f32.mrf.mxu0
    %v200 = vpop.f32.mrf.mxu0
    %v201 = vadd.f32 %v146, %v200
    %v202 = vpop.f32.mrf.mxu0
    %203 = vdwg.mxu0
    %v204 = vlaneseq
    %v205 = vshrl.u32 %v204, 7
    %v206 = vadd.s32 %v205, 8
    %v207 = vlaneseq
    %v208 = vand.u32 %v207, 127
    %vm209 = vcmp.lt.s32.totalorder %v205, 8
    %vm210 = vcmp.lt.s32.totalorder %v206, 8
    %vm211 = vcmp.lt.s32.totalorder %v208, 8
    %vm212 = vmxor %vm209, %vm211
    %vm213 = vmxor %vm210, %vm211
    %vm214 = vmxor %vm212, 1
    %vm215 = vmxor %vm213, 1
    %v216 = vsel %vm214, 0.0, -1e+30
    %v217 = vsel %vm215, 0.0, -1e+30
    %s218 = sld [smem:[#allocation9]]
    %s219 = sld [smem:[#allocation9 + $0x1]]
    %v220 = vpack.c.bf16 %v201, %v198
    %222 = vrot.lane.b32.xlu0 %v220, 96
    %v223 = vpop.permute.xlu0 %222
    %vm224 = vcmask 64512
    %v226 = vsel %vm224, %v220, 0
    %v229 = vsel %vm224, %v223, 0
    %231 = vmatprep.subr.bf16.mxu0 0
    %232 = vmatpush1.bf16.xpose.msra.mxu0 0
    %233 = vmatprep.subr.bf16.mxu0 0
    %234 = vmatpush1.bf16.xpose.msra.mxu0 0
    %235 = vmatprep.subr.bf16.mxu0 0
    %236 = vmatpush1.bf16.xpose.msra.mxu0 0
    %237 = vmatprep.subr.bf16.mxu0 0
    %238 = vmatpush1.bf16.xpose.msra.mxu0 0
    %239 = vmatprep.subr.bf16.mxu0 0
    %240 = vmatpush1.bf16.xpose.msra.mxu0 0
    %241 = vmatprep.subr.bf16.mxu0 0
    %242 = vmatpush1.bf16.xpose.msra.mxu0 0
    %243 = vmatprep.subr.bf16.mxu0 0
    %244 = vmatpush1.bf16.xpose.msra.mxu0 0
    %245 = vmatprep.subr.bf16.mxu0 0
    %246 = vmatpush1.bf16.xpose.msra.mxu0 %v229
    %247 = vmatprep.subr.bf16.mxu0 0
    %248 = vmatpush2.bf16.xpose.msra.mxu0 0
    %249 = vmatprep.subr.bf16.mxu0 0
    %250 = vmatpush2.bf16.xpose.msra.mxu0 0
    %251 = vmatprep.subr.bf16.mxu0 0
    %252 = vmatpush2.bf16.xpose.msra.mxu0 0
    %253 = vmatprep.subr.bf16.mxu0 0
    %254 = vmatpush2.bf16.xpose.msra.mxu0 0
    %255 = vmatprep.subr.bf16.mxu0 0
    %256 = vmatpush2.bf16.xpose.msra.mxu0 0
    %257 = vmatprep.subr.bf16.mxu0 0
    %258 = vmatpush2.bf16.xpose.msra.mxu0 0
    %259 = vmatprep.subr.bf16.mxu0 0
    %260 = vmatpush2.bf16.xpose.msra.mxu0 0
    %261 = vmatprep.subr.bf16.mxu0 0
    %262 = vmatpush2.bf16.xpose.msra.mxu0 0
    %263 = vmatprep.mubr.bf16.mxu0 0
    %264 = vmatmul.mubr.bf16.gmra.mxu0 %v226
    %v265 = vpop.f32.mrf.mxu0
    %v266 = vadd.f32 %v216, %v265
    %v267 = vpop.f32.mrf.mxu0
    %v268 = vpop.f32.mrf.mxu0
    %v269 = vadd.f32 %v217, %v268
    %v270 = vpop.f32.mrf.mxu0
    %271 = vdwg.mxu0
    %vm272 = vcmask 130048
    %v273 = vsel %vm272, %v266, -inf
    %274 = vmax.xlane.f32.xlu0 %v273
    %v275 = vpop.xlane.xlu0 %274
    %v276 = vsel %vm272, %v269, -inf
    %277 = vmax.xlane.f32.xlu0 %v276
    %v278 = vpop.xlane.xlu0 %277
    %v279 = vsub.f32 %v266, %v275
    %v280 = vsub.f32 %v269, %v278
    %v281 = vmul.f32 %v279, 1.442695
    %v282 = vpow.pop %v281
    %v283 = vmul.f32 %v280, 1.442695
    %v284 = vpow.pop %v283
    %v285 = vsel %vm272, %v282, 0.0
    %286 = vadd.xlane.f32.xlu0 %v285
    %v287 = vpop.xlane.xlu0 %286
    %v288 = vsel %vm272, %v284, 0.0
    %289 = vadd.xlane.f32.xlu0 %v288
    %v290 = vpop.xlane.xlu0 %289
    %v291 = vrcp.pop %v287
    %v292 = vrcp.pop %v290
    %v293 = vmul.f32 %v282, %v291
    %v294 = vmul.f32 %v284, %v292
    %v295 = vpack.c.bf16 %v294, %v293
    %296 = vrot.lane.b32.xlu0 %v220, 64
    %v297 = vpop.permute.xlu0 %296
    %v300 = vsel %vm272, %v295, 0
    %302 = vmatprep.subr.bf16.mxu0 0
    %303 = vmatpush1.bf16.msra.mxu0 0
    %304 = vmatprep.subr.bf16.mxu0 0
    %305 = vmatpush1.bf16.msra.mxu0 0
    %306 = vmatprep.subr.bf16.mxu0 0
    %307 = vmatpush1.bf16.msra.mxu0 0
    %308 = vmatprep.subr.bf16.mxu0 0
    %309 = vmatpush1.bf16.msra.mxu0 0
    %310 = vmatprep.subr.bf16.mxu0 0
    %311 = vmatpush1.bf16.msra.mxu0 0
    %312 = vmatprep.subr.bf16.mxu0 0
    %313 = vmatpush1.bf16.msra.mxu0 0
    %314 = vmatprep.subr.bf16.mxu0 0
    %315 = vmatpush1.bf16.msra.mxu0 0
    %316 = vmatprep.subr.bf16.mxu0 0
    %317 = vmatpush1.bf16.msra.mxu0 %v297
    %318 = vmatprep.subr.bf16.mxu0 0
    %319 = vmatpush2.bf16.msra.mxu0 0
    %320 = vmatprep.subr.bf16.mxu0 0
    %321 = vmatpush2.bf16.msra.mxu0 0
    %322 = vmatprep.subr.bf16.mxu0 0
    %323 = vmatpush2.bf16.msra.mxu0 0
    %324 = vmatprep.subr.bf16.mxu0 0
    %325 = vmatpush2.bf16.msra.mxu0 0
    %326 = vmatprep.subr.bf16.mxu0 0
    %327 = vmatpush2.bf16.msra.mxu0 0
    %328 = vmatprep.subr.bf16.mxu0 0
    %329 = vmatpush2.bf16.msra.mxu0 0
    %330 = vmatprep.subr.bf16.mxu0 0
    %331 = vmatpush2.bf16.msra.mxu0 0
    %332 = vmatprep.subr.bf16.mxu0 0
    %333 = vmatpush2.bf16.msra.mxu0 0
    %334 = vmatprep.mubr.bf16.mxu0 0
    %335 = vmatmul.mubr.bf16.gmra.mxu0 %v300
    %v336 = vpop.f32.mrf.mxu0
    %v337 = vadd.f32 0.0, %v336
    %v338 = vpop.f32.mrf.mxu0
    %v339 = vpop.f32.mrf.mxu0
    %v340 = vadd.f32 0.0, %v339
    %v341 = vpop.f32.mrf.mxu0
    %342 = vdwg.mxu0
    %v343 = vstv %s218
    %v344 = vmul.f32 %v343, %v337
    %v345 = vstv %s219
    %v346 = vmul.f32 %v345, %v340
    %v347 = vadd.f32 %v344, %v346
    %v348 = vpack.c.bf16 %v347, %v347
    %v349 = vld [vmem:[#allocation8] sm:$0xf]
    %350 = vrot.lane.b32.xlu0 %v220, 120
    %v351 = vpop.permute.xlu0 %350
    %352 = vrot.lane.b32.xlu0 %v220, 88
    %v353 = vpop.permute.xlu0 %352
    %v355 = vsel %vm224, %v351, 0
    %v358 = vsel %vm224, %v353, 0
    %360 = vmatprep.subr.bf16.mxu0 0
    %361 = vmatpush1.bf16.xpose.msra.mxu0 0
    %362 = vmatprep.subr.bf16.mxu0 0
    %363 = vmatpush1.bf16.xpose.msra.mxu0 0
    %364 = vmatprep.subr.bf16.mxu0 0
    %365 = vmatpush1.bf16.xpose.msra.mxu0 0
    %366 = vmatprep.subr.bf16.mxu0 0
    %367 = vmatpush1.bf16.xpose.msra.mxu0 0
    %368 = vmatprep.subr.bf16.mxu0 0
    %369 = vmatpush1.bf16.xpose.msra.mxu0 0
    %370 = vmatprep.subr.bf16.mxu0 0
    %371 = vmatpush1.bf16.xpose.msra.mxu0 0
    %372 = vmatprep.subr.bf16.mxu0 0
    %373 = vmatpush1.bf16.xpose.msra.mxu0 0
    %374 = vmatprep.subr.bf16.mxu0 0
    %375 = vmatpush1.bf16.xpose.msra.mxu0 %v358
    %376 = vmatprep.subr.bf16.mxu0 0
    %377 = vmatpush2.bf16.xpose.msra.mxu0 0
    %378 = vmatprep.subr.bf16.mxu0 0
    %379 = vmatpush2.bf16.xpose.msra.mxu0 0
    %380 = vmatprep.subr.bf16.mxu0 0
    %381 = vmatpush2.bf16.xpose.msra.mxu0 0
    %382 = vmatprep.subr.bf16.mxu0 0
    %383 = vmatpush2.bf16.xpose.msra.mxu0 0
    %384 = vmatprep.subr.bf16.mxu0 0
    %385 = vmatpush2.bf16.xpose.msra.mxu0 0
    %386 = vmatprep.subr.bf16.mxu0 0
    %387 = vmatpush2.bf16.xpose.msra.mxu0 0
    %388 = vmatprep.subr.bf16.mxu0 0
    %389 = vmatpush2.bf16.xpose.msra.mxu0 0
    %390 = vmatprep.subr.bf16.mxu0 0
    %391 = vmatpush2.bf16.xpose.msra.mxu0 0
    %392 = vmatprep.mubr.bf16.mxu0 0
    %393 = vmatmul.mubr.bf16.gmra.mxu0 %v355
    %v394 = vpop.f32.mrf.mxu0
    %v395 = vadd.f32 %v216, %v394
    %v396 = vpop.f32.mrf.mxu0
    %v397 = vpop.f32.mrf.mxu0
    %v398 = vadd.f32 %v217, %v397
    %v399 = vpop.f32.mrf.mxu0
    %400 = vdwg.mxu0
    %v401 = vsel %vm272, %v395, -inf
    %402 = vmax.xlane.f32.xlu0 %v401
    %v403 = vpop.xlane.xlu0 %402
    %v404 = vsel %vm272, %v398, -inf
    %405 = vmax.xlane.f32.xlu0 %v404
    %v406 = vpop.xlane.xlu0 %405
    %v407 = vsub.f32 %v395, %v403
    %v408 = vsub.f32 %v398, %v406
    %v409 = vmul.f32 %v407, 1.442695
    %v410 = vpow.pop %v409
    %v411 = vmul.f32 %v408, 1.442695
    %v412 = vpow.pop %v411
    %v413 = vsel %vm272, %v410, 0.0
    %414 = vadd.xlane.f32.xlu0 %v413
    %v415 = vpop.xlane.xlu0 %414
    %v416 = vsel %vm272, %v412, 0.0
    %417 = vadd.xlane.f32.xlu0 %v416
    %v418 = vpop.xlane.xlu0 %417
    %v419 = vrcp.pop %v415
    %v420 = vrcp.pop %v418
    %v421 = vmul.f32 %v410, %v419
    %v422 = vmul.f32 %v412, %v420
    %v423 = vpack.c.bf16 %v422, %v421
    %424 = vrot.lane.b32.xlu0 %v220, 56
    %v425 = vpop.permute.xlu0 %424
    %v428 = vsel %vm272, %v423, 0
    %430 = vmatprep.subr.bf16.mxu0 0
    %431 = vmatpush1.bf16.msra.mxu0 0
    %432 = vmatprep.subr.bf16.mxu0 0
    %433 = vmatpush1.bf16.msra.mxu0 0
    %434 = vmatprep.subr.bf16.mxu0 0
    %435 = vmatpush1.bf16.msra.mxu0 0
    %436 = vmatprep.subr.bf16.mxu0 0
    %437 = vmatpush1.bf16.msra.mxu0 0
    %438 = vmatprep.subr.bf16.mxu0 0
    %439 = vmatpush1.bf16.msra.mxu0 0
    %440 = vmatprep.subr.bf16.mxu0 0
    %441 = vmatpush1.bf16.msra.mxu0 0
    %442 = vmatprep.subr.bf16.mxu0 0
    %443 = vmatpush1.bf16.msra.mxu0 0
    %444 = vmatprep.subr.bf16.mxu0 0
    %445 = vmatpush1.bf16.msra.mxu0 %v425
    %446 = vmatprep.subr.bf16.mxu0 0
    %447 = vmatpush2.bf16.msra.mxu0 0
    %448 = vmatprep.subr.bf16.mxu0 0
    %449 = vmatpush2.bf16.msra.mxu0 0
    %450 = vmatprep.subr.bf16.mxu0 0
    %451 = vmatpush2.bf16.msra.mxu0 0
    %452 = vmatprep.subr.bf16.mxu0 0
    %453 = vmatpush2.bf16.msra.mxu0 0
    %454 = vmatprep.subr.bf16.mxu0 0
    %455 = vmatpush2.bf16.msra.mxu0 0
    %456 = vmatprep.subr.bf16.mxu0 0
    %457 = vmatpush2.bf16.msra.mxu0 0
    %458 = vmatprep.subr.bf16.mxu0 0
    %459 = vmatpush2.bf16.msra.mxu0 0
    %460 = vmatprep.subr.bf16.mxu0 0
    %461 = vmatpush2.bf16.msra.mxu0 0
    %462 = vmatprep.mubr.bf16.mxu0 0
    %463 = vmatmul.mubr.bf16.gmra.mxu0 %v428
    %v464 = vpop.f32.mrf.mxu0
    %v465 = vadd.f32 0.0, %v464
    %v466 = vpop.f32.mrf.mxu0
    %v467 = vpop.f32.mrf.mxu0
    %v468 = vadd.f32 0.0, %v467
    %v469 = vpop.f32.mrf.mxu0
    %470 = vdwg.mxu0
    %v471 = vmul.f32 %v343, %v465
    %v472 = vmul.f32 %v345, %v468
    %v473 = vadd.f32 %v471, %v472
    %v474 = vpack.c.bf16 %v473, %v473
    %s475 = scalar_lea.vmem [#allocation8], 4
    %v476 = vld [vmem:[%s475] sm:$0xf]
    %v478 = vsel %vm224, %v474, 0
    %vm480 = vcmask 1043456
    %v482 = vsel %vm480, %v476, 0
    %484 = vmatprep.subr.bf16.mxu0 0
    %485 = vmatpush1.bf16.msra.mxu0 0
    %486 = vmatprep.subr.bf16.mxu0 0
    %487 = vmatpush1.bf16.msra.mxu0 0
    %488 = vmatprep.subr.bf16.mxu0 0
    %489 = vmatpush1.bf16.msra.mxu0 0
    %490 = vmatprep.subr.bf16.mxu0 0
    %491 = vmatpush1.bf16.msra.mxu0 0
    %492 = vmatprep.subr.bf16.mxu0 0
    %493 = vmatpush1.bf16.msra.mxu0 0
    %494 = vmatprep.subr.bf16.mxu0 0
    %495 = vmatpush1.bf16.msra.mxu0 0
    %496 = vmatprep.subr.bf16.mxu0 0
    %497 = vmatpush1.bf16.msra.mxu0 0
    %498 = vmatprep.subr.bf16.mxu0 0
    %499 = vmatpush1.bf16.msra.mxu0 %v482
    %500 = vmatprep.subr.bf16.mxu0 0
    %501 = vmatpush2.bf16.msra.mxu0 0
    %502 = vmatprep.subr.bf16.mxu0 0
    %503 = vmatpush2.bf16.msra.mxu0 0
    %504 = vmatprep.subr.bf16.mxu0 0
    %505 = vmatpush2.bf16.msra.mxu0 0
    %506 = vmatprep.subr.bf16.mxu0 0
    %507 = vmatpush2.bf16.msra.mxu0 0
    %508 = vmatprep.subr.bf16.mxu0 0
    %509 = vmatpush2.bf16.msra.mxu0 0
    %510 = vmatprep.subr.bf16.mxu0 0
    %511 = vmatpush2.bf16.msra.mxu0 0
    %512 = vmatprep.subr.bf16.mxu0 0
    %513 = vmatpush2.bf16.msra.mxu0 0
    %514 = vmatprep.subr.bf16.mxu0 0
    %515 = vmatpush2.bf16.msra.mxu0 0
    %516 = vmatprep.mubr.bf16.mxu0 0
    %517 = vmatmul.mubr.bf16.gmra.mxu0 %v478
    %v518 = vpop.f32.mrf.mxu0
    %v519 = vadd.f32 0.0, %v518
    %v520 = vpop.f32.mrf.mxu0
    %v521 = vpop.f32.mrf.mxu0
    %v522 = vpop.f32.mrf.mxu0
    %523 = vdwg.mxu0
    %v525 = vsel %vm224, %v348, 0
    %v528 = vsel %vm480, %v349, 0
    %530 = vmatprep.subr.bf16.mxu0 0
    %531 = vmatpush1.bf16.msra.mxu0 0
    %532 = vmatprep.subr.bf16.mxu0 0
    %533 = vmatpush1.bf16.msra.mxu0 0
    %534 = vmatprep.subr.bf16.mxu0 0
    %535 = vmatpush1.bf16.msra.mxu0 0
    %536 = vmatprep.subr.bf16.mxu0 0
    %537 = vmatpush1.bf16.msra.mxu0 0
    %538 = vmatprep.subr.bf16.mxu0 0
    %539 = vmatpush1.bf16.msra.mxu0 0
    %540 = vmatprep.subr.bf16.mxu0 0
    %541 = vmatpush1.bf16.msra.mxu0 0
    %542 = vmatprep.subr.bf16.mxu0 0
    %543 = vmatpush1.bf16.msra.mxu0 0
    %544 = vmatprep.subr.bf16.mxu0 0
    %545 = vmatpush1.bf16.msra.mxu0 %v528
    %546 = vmatprep.subr.bf16.mxu0 0
    %547 = vmatpush2.bf16.msra.mxu0 0
    %548 = vmatprep.subr.bf16.mxu0 0
    %549 = vmatpush2.bf16.msra.mxu0 0
    %550 = vmatprep.subr.bf16.mxu0 0
    %551 = vmatpush2.bf16.msra.mxu0 0
    %552 = vmatprep.subr.bf16.mxu0 0
    %553 = vmatpush2.bf16.msra.mxu0 0
    %554 = vmatprep.subr.bf16.mxu0 0
    %555 = vmatpush2.bf16.msra.mxu0 0
    %556 = vmatprep.subr.bf16.mxu0 0
    %557 = vmatpush2.bf16.msra.mxu0 0
    %558 = vmatprep.subr.bf16.mxu0 0
    %559 = vmatpush2.bf16.msra.mxu0 0
    %560 = vmatprep.subr.bf16.mxu0 0
    %561 = vmatpush2.bf16.msra.mxu0 0
    %562 = vmatprep.mubr.bf16.mxu0 0
    %563 = vmatmul.mubr.bf16.gmra.mxu0 %v525
    %v564 = vpop.f32.mrf.mxu0
    %v565 = vadd.f32 %v519, %v564
    %v566 = vpop.f32.mrf.mxu0
    %v567 = vpop.f32.mrf.mxu0
    %v568 = vpop.f32.mrf.mxu0
    %569 = vdwg.mxu0
    %570 = vrot.lane.b32.xlu0 %v220, 112
    %v571 = vpop.permute.xlu0 %570
    %572 = vrot.lane.b32.xlu0 %v220, 80
    %v573 = vpop.permute.xlu0 %572
    %v575 = vsel %vm224, %v571, 0
    %v578 = vsel %vm224, %v573, 0
    %580 = vmatprep.subr.bf16.mxu0 0
    %581 = vmatpush1.bf16.xpose.msra.mxu0 0
    %582 = vmatprep.subr.bf16.mxu0 0
    %583 = vmatpush1.bf16.xpose.msra.mxu0 0
    %584 = vmatprep.subr.bf16.mxu0 0
    %585 = vmatpush1.bf16.xpose.msra.mxu0 0
    %586 = vmatprep.subr.bf16.mxu0 0
    %587 = vmatpush1.bf16.xpose.msra.mxu0 0
    %588 = vmatprep.subr.bf16.mxu0 0
    %589 = vmatpush1.bf16.xpose.msra.mxu0 0
    %590 = vmatprep.subr.bf16.mxu0 0
    %591 = vmatpush1.bf16.xpose.msra.mxu0 0
    %592 = vmatprep.subr.bf16.mxu0 0
    %593 = vmatpush1.bf16.xpose.msra.mxu0 0
    %594 = vmatprep.subr.bf16.mxu0 0
    %595 = vmatpush1.bf16.xpose.msra.mxu0 %v578
    %596 = vmatprep.subr.bf16.mxu0 0
    %597 = vmatpush2.bf16.xpose.msra.mxu0 0
    %598 = vmatprep.subr.bf16.mxu0 0
    %599 = vmatpush2.bf16.xpose.msra.mxu0 0
    %600 = vmatprep.subr.bf16.mxu0 0
    %601 = vmatpush2.bf16.xpose.msra.mxu0 0
    %602 = vmatprep.subr.bf16.mxu0 0
    %603 = vmatpush2.bf16.xpose.msra.mxu0 0
    %604 = vmatprep.subr.bf16.mxu0 0
    %605 = vmatpush2.bf16.xpose.msra.mxu0 0
    %606 = vmatprep.subr.bf16.mxu0 0
    %607 = vmatpush2.bf16.xpose.msra.mxu0 0
    %608 = vmatprep.subr.bf16.mxu0 0
    %609 = vmatpush2.bf16.xpose.msra.mxu0 0
    %610 = vmatprep.subr.bf16.mxu0 0
    %611 = vmatpush2.bf16.xpose.msra.mxu0 0
    %612 = vmatprep.mubr.bf16.mxu0 0
    %613 = vmatmul.mubr.bf16.gmra.mxu0 %v575
    %v614 = vpop.f32.mrf.mxu0
    %v615 = vadd.f32 %v216, %v614
    %v616 = vpop.f32.mrf.mxu0
    %v617 = vpop.f32.mrf.mxu0
    %v618 = vadd.f32 %v217, %v617
    %v619 = vpop.f32.mrf.mxu0
    %620 = vdwg.mxu0
    %v621 = vsel %vm272, %v615, -inf
    %622 = vmax.xlane.f32.xlu0 %v621
    %v623 = vpop.xlane.xlu0 %622
    %v624 = vsel %vm272, %v618, -inf
    %625 = vmax.xlane.f32.xlu0 %v624
    %v626 = vpop.xlane.xlu0 %625
    %v627 = vsub.f32 %v615, %v623
    %v628 = vsub.f32 %v618, %v626
    %v629 = vmul.f32 %v627, 1.442695
    %v630 = vpow.pop %v629
    %v631 = vmul.f32 %v628, 1.442695
    %v632 = vpow.pop %v631
    %v633 = vsel %vm272, %v630, 0.0
    %634 = vadd.xlane.f32.xlu0 %v633
    %v635 = vpop.xlane.xlu0 %634
    %v636 = vsel %vm272, %v632, 0.0
    %637 = vadd.xlane.f32.xlu0 %v636
    %v638 = vpop.xlane.xlu0 %637
    %v639 = vrcp.pop %v635
    %v640 = vrcp.pop %v638
    %v641 = vmul.f32 %v630, %v639
    %v642 = vmul.f32 %v632, %v640
    %v643 = vpack.c.bf16 %v642, %v641
    %644 = vrot.lane.b32.xlu0 %v220, 48
    %v645 = vpop.permute.xlu0 %644
    %v648 = vsel %vm272, %v643, 0
    %650 = vmatprep.subr.bf16.mxu0 0
    %651 = vmatpush1.bf16.msra.mxu0 0
    %652 = vmatprep.subr.bf16.mxu0 0
    %653 = vmatpush1.bf16.msra.mxu0 0
    %654 = vmatprep.subr.bf16.mxu0 0
    %655 = vmatpush1.bf16.msra.mxu0 0
    %656 = vmatprep.subr.bf16.mxu0 0
    %657 = vmatpush1.bf16.msra.mxu0 0
    %658 = vmatprep.subr.bf16.mxu0 0
    %659 = vmatpush1.bf16.msra.mxu0 0
    %660 = vmatprep.subr.bf16.mxu0 0
    %661 = vmatpush1.bf16.msra.mxu0 0
    %662 = vmatprep.subr.bf16.mxu0 0
    %663 = vmatpush1.bf16.msra.mxu0 0
    %664 = vmatprep.subr.bf16.mxu0 0
    %665 = vmatpush1.bf16.msra.mxu0 %v645
    %666 = vmatprep.subr.bf16.mxu0 0
    %667 = vmatpush2.bf16.msra.mxu0 0
    %668 = vmatprep.subr.bf16.mxu0 0
    %669 = vmatpush2.bf16.msra.mxu0 0
    %670 = vmatprep.subr.bf16.mxu0 0
    %671 = vmatpush2.bf16.msra.mxu0 0
    %672 = vmatprep.subr.bf16.mxu0 0
    %673 = vmatpush2.bf16.msra.mxu0 0
    %674 = vmatprep.subr.bf16.mxu0 0
    %675 = vmatpush2.bf16.msra.mxu0 0
    %676 = vmatprep.subr.bf16.mxu0 0
    %677 = vmatpush2.bf16.msra.mxu0 0
    %678 = vmatprep.subr.bf16.mxu0 0
    %679 = vmatpush2.bf16.msra.mxu0 0
    %680 = vmatprep.subr.bf16.mxu0 0
    %681 = vmatpush2.bf16.msra.mxu0 0
    %682 = vmatprep.mubr.bf16.mxu0 0
    %683 = vmatmul.mubr.bf16.gmra.mxu0 %v648
    %v684 = vpop.f32.mrf.mxu0
    %v685 = vadd.f32 0.0, %v684
    %v686 = vpop.f32.mrf.mxu0
    %v687 = vpop.f32.mrf.mxu0
    %v688 = vadd.f32 0.0, %v687
    %v689 = vpop.f32.mrf.mxu0
    %690 = vdwg.mxu0
    %v691 = vmul.f32 %v343, %v685
    %v692 = vmul.f32 %v345, %v688
    %v693 = vadd.f32 %v691, %v692
    %v694 = vpack.c.bf16 %v693, %v693
    %s695 = scalar_lea.vmem [#allocation8], 8
    %v696 = vld [vmem:[%s695] sm:$0xf]
    %v698 = vsel %vm224, %v694, 0
    %v701 = vsel %vm480, %v696, 0
    %703 = vmatprep.subr.bf16.mxu0 0
    %704 = vmatpush1.bf16.msra.mxu0 0
    %705 = vmatprep.subr.bf16.mxu0 0
    %706 = vmatpush1.bf16.msra.mxu0 0
    %707 = vmatprep.subr.bf16.mxu0 0
    %708 = vmatpush1.bf16.msra.mxu0 0
    %709 = vmatprep.subr.bf16.mxu0 0
    %710 = vmatpush1.bf16.msra.mxu0 0
    %711 = vmatprep.subr.bf16.mxu0 0
    %712 = vmatpush1.bf16.msra.mxu0 0
    %713 = vmatprep.subr.bf16.mxu0 0
    %714 = vmatpush1.bf16.msra.mxu0 0
    %715 = vmatprep.subr.bf16.mxu0 0
    %716 = vmatpush1.bf16.msra.mxu0 0
    %717 = vmatprep.subr.bf16.mxu0 0
    %718 = vmatpush1.bf16.msra.mxu0 %v701
    %719 = vmatprep.subr.bf16.mxu0 0
    %720 = vmatpush2.bf16.msra.mxu0 0
    %721 = vmatprep.subr.bf16.mxu0 0
    %722 = vmatpush2.bf16.msra.mxu0 0
    %723 = vmatprep.subr.bf16.mxu0 0
    %724 = vmatpush2.bf16.msra.mxu0 0
    %725 = vmatprep.subr.bf16.mxu0 0
    %726 = vmatpush2.bf16.msra.mxu0 0
    %727 = vmatprep.subr.bf16.mxu0 0
    %728 = vmatpush2.bf16.msra.mxu0 0
    %729 = vmatprep.subr.bf16.mxu0 0
    %730 = vmatpush2.bf16.msra.mxu0 0
    %731 = vmatprep.subr.bf16.mxu0 0
    %732 = vmatpush2.bf16.msra.mxu0 0
    %733 = vmatprep.subr.bf16.mxu0 0
    %734 = vmatpush2.bf16.msra.mxu0 0
    %735 = vmatprep.mubr.bf16.mxu0 0
    %736 = vmatmul.mubr.bf16.gmra.mxu0 %v698
    %v737 = vpop.f32.mrf.mxu0
    %v738 = vadd.f32 0.0, %v737
    %v739 = vpop.f32.mrf.mxu0
    %v740 = vpop.f32.mrf.mxu0
    %v741 = vpop.f32.mrf.mxu0
    %742 = vdwg.mxu0
    %v743 = vadd.f32 %v565, %v738
    %744 = vrot.lane.b32.xlu0 %v220, 104
    %v745 = vpop.permute.xlu0 %744
    %746 = vrot.lane.b32.xlu0 %v220, 72
    %v747 = vpop.permute.xlu0 %746
    %v749 = vsel %vm224, %v745, 0
    %v752 = vsel %vm224, %v747, 0
    %754 = vmatprep.subr.bf16.mxu0 0
    %755 = vmatpush1.bf16.xpose.msra.mxu0 0
    %756 = vmatprep.subr.bf16.mxu0 0
    %757 = vmatpush1.bf16.xpose.msra.mxu0 0
    %758 = vmatprep.subr.bf16.mxu0 0
    %759 = vmatpush1.bf16.xpose.msra.mxu0 0
    %760 = vmatprep.subr.bf16.mxu0 0
    %761 = vmatpush1.bf16.xpose.msra.mxu0 0
    %762 = vmatprep.subr.bf16.mxu0 0
    %763 = vmatpush1.bf16.xpose.msra.mxu0 0
    %764 = vmatprep.subr.bf16.mxu0 0
    %765 = vmatpush1.bf16.xpose.msra.mxu0 0
    %766 = vmatprep.subr.bf16.mxu0 0
    %767 = vmatpush1.bf16.xpose.msra.mxu0 0
    %768 = vmatprep.subr.bf16.mxu0 0
    %769 = vmatpush1.bf16.xpose.msra.mxu0 %v752
    %770 = vmatprep.subr.bf16.mxu0 0
    %771 = vmatpush2.bf16.xpose.msra.mxu0 0
    %772 = vmatprep.subr.bf16.mxu0 0
    %773 = vmatpush2.bf16.xpose.msra.mxu0 0
    %774 = vmatprep.subr.bf16.mxu0 0
    %775 = vmatpush2.bf16.xpose.msra.mxu0 0
    %776 = vmatprep.subr.bf16.mxu0 0
    %777 = vmatpush2.bf16.xpose.msra.mxu0 0
    %778 = vmatprep.subr.bf16.mxu0 0
    %779 = vmatpush2.bf16.xpose.msra.mxu0 0
    %780 = vmatprep.subr.bf16.mxu0 0
    %781 = vmatpush2.bf16.xpose.msra.mxu0 0
    %782 = vmatprep.subr.bf16.mxu0 0
    %783 = vmatpush2.bf16.xpose.msra.mxu0 0
    %784 = vmatprep.subr.bf16.mxu0 0
    %785 = vmatpush2.bf16.xpose.msra.mxu0 0
    %786 = vmatprep.mubr.bf16.mxu0 0
    %787 = vmatmul.mubr.bf16.gmra.mxu0 %v749
    %v788 = vpop.f32.mrf.mxu0
    %v789 = vadd.f32 %v216, %v788
    %v790 = vpop.f32.mrf.mxu0
    %v791 = vpop.f32.mrf.mxu0
    %v792 = vadd.f32 %v217, %v791
    %v793 = vpop.f32.mrf.mxu0
    %794 = vdwg.mxu0
    %v795 = vsel %vm272, %v789, -inf
    %796 = vmax.xlane.f32.xlu0 %v795
    %v797 = vpop.xlane.xlu0 %796
    %v798 = vsel %vm272, %v792, -inf
    %799 = vmax.xlane.f32.xlu0 %v798
    %v800 = vpop.xlane.xlu0 %799
    %v801 = vsub.f32 %v789, %v797
    %v802 = vsub.f32 %v792, %v800
    %v803 = vmul.f32 %v801, 1.442695
    %v804 = vpow.pop %v803
    %v805 = vmul.f32 %v802, 1.442695
    %v806 = vpow.pop %v805
    %v807 = vsel %vm272, %v804, 0.0
    %808 = vadd.xlane.f32.xlu0 %v807
    %v809 = vpop.xlane.xlu0 %808
    %v810 = vsel %vm272, %v806, 0.0
    %811 = vadd.xlane.f32.xlu0 %v810
    %v812 = vpop.xlane.xlu0 %811
    %v813 = vrcp.pop %v809
    %v814 = vrcp.pop %v812
    %v815 = vmul.f32 %v804, %v813
    %v816 = vmul.f32 %v806, %v814
    %v817 = vpack.c.bf16 %v816, %v815
    %818 = vrot.lane.b32.xlu0 %v220, 40
    %v819 = vpop.permute.xlu0 %818
    %v822 = vsel %vm272, %v817, 0
    %824 = vmatprep.subr.bf16.mxu0 0
    %825 = vmatpush1.bf16.msra.mxu0 0
    %826 = vmatprep.subr.bf16.mxu0 0
    %827 = vmatpush1.bf16.msra.mxu0 0
    %828 = vmatprep.subr.bf16.mxu0 0
    %829 = vmatpush1.bf16.msra.mxu0 0
    %830 = vmatprep.subr.bf16.mxu0 0
    %831 = vmatpush1.bf16.msra.mxu0 0
    %832 = vmatprep.subr.bf16.mxu0 0
    %833 = vmatpush1.bf16.msra.mxu0 0
    %834 = vmatprep.subr.bf16.mxu0 0
    %835 = vmatpush1.bf16.msra.mxu0 0
    %836 = vmatprep.subr.bf16.mxu0 0
    %837 = vmatpush1.bf16.msra.mxu0 0
    %838 = vmatprep.subr.bf16.mxu0 0
    %839 = vmatpush1.bf16.msra.mxu0 %v819
    %840 = vmatprep.subr.bf16.mxu0 0
    %841 = vmatpush2.bf16.msra.mxu0 0
    %842 = vmatprep.subr.bf16.mxu0 0
    %843 = vmatpush2.bf16.msra.mxu0 0
    %844 = vmatprep.subr.bf16.mxu0 0
    %845 = vmatpush2.bf16.msra.mxu0 0
    %846 = vmatprep.subr.bf16.mxu0 0
    %847 = vmatpush2.bf16.msra.mxu0 0
    %848 = vmatprep.subr.bf16.mxu0 0
    %849 = vmatpush2.bf16.msra.mxu0 0
    %850 = vmatprep.subr.bf16.mxu0 0
    %851 = vmatpush2.bf16.msra.mxu0 0
    %852 = vmatprep.subr.bf16.mxu0 0
    %853 = vmatpush2.bf16.msra.mxu0 0
    %854 = vmatprep.subr.bf16.mxu0 0
    %855 = vmatpush2.bf16.msra.mxu0 0
    %856 = vmatprep.mubr.bf16.mxu0 0
    %857 = vmatmul.mubr.bf16.gmra.mxu0 %v822
    %v858 = vpop.f32.mrf.mxu0
    %v859 = vadd.f32 0.0, %v858
    %v860 = vpop.f32.mrf.mxu0
    %v861 = vpop.f32.mrf.mxu0
    %v862 = vadd.f32 0.0, %v861
    %v863 = vpop.f32.mrf.mxu0
    %864 = vdwg.mxu0
    %v865 = vmul.f32 %v343, %v859
    %v866 = vmul.f32 %v345, %v862
    %v867 = vadd.f32 %v865, %v866
    %v868 = vpack.c.bf16 %v867, %v867
    %s869 = scalar_lea.vmem [#allocation8], 12
    %v870 = vld [vmem:[%s869] sm:$0xf]
    %v872 = vsel %vm224, %v868, 0
    %v875 = vsel %vm480, %v870, 0
    %877 = vmatprep.subr.bf16.mxu0 0
    %878 = vmatpush1.bf16.msra.mxu0 0
    %879 = vmatprep.subr.bf16.mxu0 0
    %880 = vmatpush1.bf16.msra.mxu0 0
    %881 = vmatprep.subr.bf16.mxu0 0
    %882 = vmatpush1.bf16.msra.mxu0 0
    %883 = vmatprep.subr.bf16.mxu0 0
    %884 = vmatpush1.bf16.msra.mxu0 0
    %885 = vmatprep.subr.bf16.mxu0 0
    %886 = vmatpush1.bf16.msra.mxu0 0
    %887 = vmatprep.subr.bf16.mxu0 0
    %888 = vmatpush1.bf16.msra.mxu0 0
    %889 = vmatprep.subr.bf16.mxu0 0
    %890 = vmatpush1.bf16.msra.mxu0 0
    %891 = vmatprep.subr.bf16.mxu0 0
    %892 = vmatpush1.bf16.msra.mxu0 %v875
    %893 = vmatprep.subr.bf16.mxu0 0
    %894 = vmatpush2.bf16.msra.mxu0 0
    %895 = vmatprep.subr.bf16.mxu0 0
    %896 = vmatpush2.bf16.msra.mxu0 0
    %897 = vmatprep.subr.bf16.mxu0 0
    %898 = vmatpush2.bf16.msra.mxu0 0
    %899 = vmatprep.subr.bf16.mxu0 0
    %900 = vmatpush2.bf16.msra.mxu0 0
    %901 = vmatprep.subr.bf16.mxu0 0
    %902 = vmatpush2.bf16.msra.mxu0 0
    %903 = vmatprep.subr.bf16.mxu0 0
    %904 = vmatpush2.bf16.msra.mxu0 0
    %905 = vmatprep.subr.bf16.mxu0 0
    %906 = vmatpush2.bf16.msra.mxu0 0
    %907 = vmatprep.subr.bf16.mxu0 0
    %908 = vmatpush2.bf16.msra.mxu0 0
    %909 = vmatprep.mubr.bf16.mxu0 0
    %910 = vmatmul.mubr.bf16.gmra.mxu0 %v872
    %v911 = vpop.f32.mrf.mxu0
    %v912 = vadd.f32 0.0, %v911
    %v913 = vpop.f32.mrf.mxu0
    %v914 = vpop.f32.mrf.mxu0
    %v915 = vpop.f32.mrf.mxu0
    %916 = vdwg.mxu0
    %v917 = vadd.f32 %v743, %v912
    %s918 = sadd.f32 %s218, %s219
    %v919 = vld [vmem:[%s6] sm:$0x1]
    %v920 = vstv %s918
    %v921 = vmul.f32 %v920, %v919
    %v923 = vlaneseq
    %v924 = vshrl.u32 %v923, 7
    %v925 = vsub.s32 0, %v924
    %v926 = vrot.slane %v921, %v925
    %v928 = vadd.f32 %v917, %v926
    %929 = vst.msk [vmem:[#allocation10] sm:$0xff] %vm87, %v928
    // Predicated region
    $region50: #{tpu_custom_call.1} parent=1 // pred_check
      _
    $region51: #{tpu_custom_call.1} parent=1 // pred_check_branch
      %931 = sbr.rel (0) target = $region53
    $region52: #{tpu_custom_call.1} parent=1 // pred_region
      %s933 = ssub.s32 128, 128
      %934 = vsyncadd [#allocation4], %s933
      %s936 = sshll.u32 [#allocation10], 4
      %s937 = int_to_ptr.vmem [resolvable:$true] %s936
      %939 = dma.vmem_to_hbm [thread:$0]  %s937, 128, %s8, [#allocation4]
    $region53: #{tpu_custom_call.1} parent=1 // pred_fallthru
      _
    // Predicated region
    $region54: #{tpu_custom_call.1} parent=1 // pred_check
      _
    $region55: #{tpu_custom_call.1} parent=1 // pred_check_branch
      %941 = sbr.rel (0) target = $region57
    $region56: #{tpu_custom_call.1} parent=1 // pred_region
      %942 = dma.done [#allocation4], 128
    $region57: #{tpu_custom_call.1} parent=1 // pred_fallthru
      _
    %943 = vsyncpa [#allocation3], 1
    %944 = vsyncpa [#allocation7], 1
    %945 = vsyncpa [#allocation4], 1
    %946 = vsyncpa [#allocation5], 1

</llo_original>
